<compile_context>
chip_gen: v7x
topology: tpu7x:2x2x1
jax: 0.10.0
libtpu: 0.0.40
codegen_flags: <defaults>
</compile_context>

<pallas_src>
import numpy as np
import jax
import jax.numpy as jnp
from jax.experimental import pallas as pl
from jax.experimental.pallas import tpu as pltpu

# ----------------------------- model constants (synthetic) -----------------------------
N_K = 16        # joint_num
N_V = 512       # vertex_num
N_CORE = 28     # bone_lengths_core dimension
KDIM = 72       # 4*N_K (=64) + 1 ones-column for translation, padded up to a multiple of 8

# kinematic tree: simple chain, parent[i] < i for i >= 1 (parent[0] unused)
PARENT = np.array([0] + [i - 1 for i in range(1, N_K)], dtype=np.int64)
# bone_length_mapper: -1 entries fall through to the "no scaling" branch
BONE_LENGTH_MAPPER = np.array([-1, -1] + list(range(N_K - 2)), dtype=np.int64)


# ----------------------------- plain-JAX glue (kinematic chain) -------------------------
def euler2mat(r):
    """r: [M, 3] euler ZYX angles -> [M, 3, 3] rotation matrices (matches torch euler2mat)."""
    z, y, x = r[:, 0], r[:, 1], r[:, 2]
    cx, sx = jnp.cos(x), jnp.sin(x)
    cy, sy = jnp.cos(y), jnp.sin(y)
    cz, sz = jnp.cos(z), jnp.sin(z)
    one, zero = jnp.ones_like(x), jnp.zeros_like(x)
    Rx = jnp.stack([jnp.stack([one, zero, zero], -1),
                    jnp.stack([zero, cx, -sx], -1),
                    jnp.stack([zero, sx, cx], -1)], -2)
    Ry = jnp.stack([jnp.stack([cy, zero, sy], -1),
                    jnp.stack([zero, one, zero], -1),
                    jnp.stack([-sy, zero, cy], -1)], -2)
    Rz = jnp.stack([jnp.stack([cz, -sz, zero], -1),
                    jnp.stack([sz, cz, zero], -1),
                    jnp.stack([zero, zero, one], -1)], -2)
    return jnp.matmul(jnp.matmul(Rz, Ry), Rx)


def with_zeros(x34):
    """[B, 3, 4] -> [B, 4, 4] by appending [0,0,0,1]."""
    bottom = jnp.broadcast_to(
        jnp.array([[[0.0, 0.0, 0.0, 1.0]]], dtype=x34.dtype), (x34.shape[0], 1, 4))
    return jnp.concatenate([x34, bottom], axis=1)


def lR2G(lRs, J, blc, center_bone_length):
    """Mirror of BodyModelTorch._lR2G. lRs:[B,N_K,3,3], J:[B,N_K,3], blc:[B,28], cbl:[B,1]."""
    batch = lRs.shape[0]
    results = [with_zeros(jnp.concatenate([lRs[:, 0], J[:, 0, :].reshape(-1, 3, 1)], axis=2))]
    for i in range(1, N_K):
        p = int(PARENT[i])
        blid = int(BONE_LENGTH_MAPPER[i])
        diff = J[:, i, :] - J[:, p, :]
        if i == 1:
            off = diff * center_bone_length
        elif blid < 0:
            off = diff
        else:
            off = diff * blc[:, blid].reshape(-1, 1)
        local = with_zeros(jnp.concatenate([lRs[:, i], off.reshape(-1, 3, 1)], axis=2))
        results.append(jnp.matmul(results[p], local))
    affine = jnp.stack(results, axis=1)                     # [B, N_K, 4, 4]
    J_final = affine[:, :, :3, 3]                           # [B, N_K, 3]
    Jh = jnp.concatenate([J, jnp.zeros((batch, N_K, 1), J.dtype)], axis=2)  # [B, N_K, 4]
    deformed = jnp.matmul(affine, Jh[..., None])[..., 0]    # [B, N_K, 4]
    G = affine.at[..., 3].add(-deformed)                    # affine - pack(deformed)
    return G, J_final


# ----------------------------- Pallas kernel: LBS skinning hot path ---------------------
def skin_kernel(g_ref, m_ref, o_ref):
    # g_ref : [1, 3*B_TILE, KDIM]  per-chunk affine rows (scale & translation folded in)
    # m_ref : [KDIM, N_V]          shared (W (x) rest_h)^T, ones-row appended, zero-padded
    # o_ref : [1, 3*B_TILE, N_V]   lane-dense output slab (N_V = 4 x 128 lanes)
    o_ref[0] = jnp.dot(g_ref[0], m_ref[...], preferred_element_type=jnp.float32)


def skin_pallas(M_T, G_lhs):
    num_chunks, rows, kdim = G_lhs.shape
    n_v = M_T.shape[1]
    return pl.pallas_call(
        skin_kernel,
        out_shape=jax.ShapeDtypeStruct((num_chunks, rows, n_v), M_T.dtype),
        grid=(num_chunks,),
        in_specs=[
            pl.BlockSpec((1, rows, kdim), lambda c: (c, 0, 0)),   # per-chunk affines
            pl.BlockSpec((kdim, n_v), lambda c: (0, 0)),          # shared M (not re-fetched)
        ],
        out_specs=pl.BlockSpec((1, rows, n_v), lambda c: (c, 0, 0)),
        compiler_params=pltpu.CompilerParams(dimension_semantics=("parallel",)),
    )(G_lhs, M_T)


def _choose_b_tile(batch):
    # Large batches: amortize per-step overhead with multi-element chunks.
    # Small batches: keep >= 2 chunks so v7x's two TensorCores both get work.
    if batch >= 16:
        return 8
    if batch >= 2:
        return (batch + 1) // 2
    return 1


# ----------------------------- full forward (glue + kernel) -----------------------------
def body_model_forward(params, thetas, bone_lengths_core, center_bone_length, trans, scale,
                       b_tile=None):
    v_template, t_pose_joints, weights = params
    batch = thetas.shape[0]
    dtype = v_template.dtype

    # --- kinematic chain (tiny, strictly sequential: plain JAX) ---
    J = jnp.tile(t_pose_joints[None], (batch, 1, 1))                       # [B, N_K, 3]
    blc = jax.nn.sigmoid(bone_lengths_core / 5.0) * 2.0                    # [B, 28]
    lRs = euler2mat(thetas.reshape(-1, 3)).reshape(batch, N_K, 3, 3)       # rotation_type='euler'
    G, J_final = lR2G(lRs, J, blc, center_bone_length)                     # G: [B, N_K, 4, 4]

    # --- pose-independent skinning matrix M[v, 4k+c] = W[v,k] * rest_h[v,c] ---
    W_T = weights.T                                                        # [N_V, N_K]
    rest_h = jnp.concatenate([v_template, jnp.ones((N_V, 1), dtype)], axis=1)  # [N_V, 4]
    M = (W_T[:, :, None] * rest_h[:, None, :]).reshape(N_V, 4 * N_K)       # [N_V, 64]
    M_ext = jnp.concatenate(
        [M, jnp.ones((N_V, 1), dtype), jnp.zeros((N_V, KDIM - 4 * N_K - 1), dtype)], axis=1)
    M_T = M_ext.T                                                          # [KDIM, N_V]

    # --- per-batch affine columns, scale folded exactly, translation via the ones-row ---
    # G_col[b, 4k+c, r] = G[b, k, r, c]
    G_col = jnp.transpose(G[:, :, :3, :], (0, 1, 3, 2)).reshape(batch, 4 * N_K, 3)  # [B,64,3]
    G_ext = jnp.concatenate([
        scale.reshape(batch, 1, 1) * G_col,                                # s * G  (exact fold)
        trans.reshape(batch, 1, 3),                                        # + t via ones-column
        jnp.zeros((batch, KDIM - 4 * N_K - 1, 3), dtype),
    ], axis=1)                                                             # [B, KDIM, 3]

    # --- chunk the batch into the matmul M-dimension ---
    if b_tile is None:
        b_tile = _choose_b_tile(batch)
    num_chunks = pl.cdiv(batch, b_tile)
    batch_pad = num_chunks * b_tile
    if batch_pad != batch:
        G_ext = jnp.concatenate(
            [G_ext, jnp.zeros((batch_pad - batch, KDIM, 3), dtype)], axis=0)
    # rows within a chunk are ordered (bb, r): row = 3*bb + r
    G_lhs = jnp.transpose(G_ext, (0, 2, 1)).reshape(num_chunks, b_tile * 3, KDIM)

    out = skin_pallas(M_T, G_lhs)                                          # [chunks, 3*bt, N_V]
    V_final = out.reshape(batch_pad, 3, N_V)[:batch].transpose(0, 2, 1)    # [B, N_V, 3]

    # joints: 16x3 per element -> negligible, done in XLA (review: drop from kernel)
    J_posed = J_final * scale.reshape(batch, 1, 1) + trans.reshape(batch, 1, 3)
    return V_final, J_posed


# pure-jnp reference (mirrors the torch tensordot/matmul path) for correctness check
def body_model_forward_ref(params, thetas, bone_lengths_core, center_bone_length, trans, scale):
    v_template, t_pose_joints, weights = params
    batch = thetas.shape[0]
    J = jnp.tile(t_pose_joints[None], (batch, 1, 1))
    blc = jax.nn.sigmoid(bone_lengths_core / 5.0) * 2.0
    lRs = euler2mat(thetas.reshape(-1, 3)).reshape(batch, N_K, 3, 3)
    G, J_final = lR2G(lRs, J, blc, center_bone_length)
    v_posed = jnp.tile(v_template[None], (batch, 1, 1))
    T = jnp.einsum('nkrc,kv->nvrc', G, weights)                            # tensordot + permute
    rest_h = jnp.concatenate([v_posed, jnp.ones((batch, N_V, 1), v_posed.dtype)], axis=2)
    v = jnp.einsum('nvrc,nvc->nvr', T, rest_h)[:, :, :3]
    s = scale.reshape(batch, 1, 1)
    t = trans.reshape(batch, 1, 3)
    return v * s + t, J_final * s + t


# ----------------------------- main ------------------------------------------------------
if __name__ == "__main__":
    key = jax.random.PRNGKey(0)
    keys = jax.random.split(key, 10)

    # deterministic synthetic "model parameters"
    v_template = jax.random.normal(keys[0], (N_V, 3), jnp.float32) * 0.1
    t_pose_joints = jax.random.normal(keys[1], (N_K, 3), jnp.float32) * 0.2
    weights = jax.nn.softmax(jax.random.normal(keys[2], (N_V, N_K), jnp.float32), axis=-1).T  # [N_K, N_V]
    params = (v_template, t_pose_joints, weights)

    # forward inputs
    batch = 2
    thetas = jax.random.normal(keys[3], (batch, N_K * 3), jnp.float32) * 0.3
    bone_lengths_core = jax.random.normal(keys[4], (batch, N_CORE), jnp.float32)
    center_bone_length = jnp.abs(jax.random.normal(keys[5], (batch, 1), jnp.float32)) + 0.5
    trans = jax.random.normal(keys[6], (batch, 3), jnp.float32)
    scale = jnp.abs(jax.random.normal(keys[7], (batch,), jnp.float32)) + 0.5

    V_final, J_posed = body_model_forward(
        params, thetas, bone_lengths_core, center_bone_length, trans, scale)
    V_final, J_posed = jax.block_until_ready((V_final, J_posed))

    V_ref, J_ref = body_model_forward_ref(
        params, thetas, bone_lengths_core, center_bone_length, trans, scale)

    np.testing.assert_allclose(np.asarray(V_final), np.asarray(V_ref), rtol=1e-3, atol=1e-3)
    np.testing.assert_allclose(np.asarray(J_posed), np.asarray(J_ref), rtol=1e-3, atol=1e-3)

    # TODO(synk): forward_keypoints22 / write_obj / faces & reduced_ids rely on external
    # txt/json assets and are not part of the forward hot path; they are omitted.
    print("KERNEL_OK")
</pallas_src>

<mosaic_0001>
module attributes {stable_mosaic.version = 11 : i64} {
  func.func @skin_kernel(%arg0: i32, %arg1: memref<1x3x72xf32, #tpu.memory_space<vmem>>, %arg2: memref<72x512xf32, #tpu.memory_space<vmem>>, %arg3: memref<1x3x512xf32, #tpu.memory_space<vmem>>) attributes {dimension_semantics = [#tpu.dimension_semantics<parallel>], iteration_bounds = array<i64: 2>, scalar_prefetch = 0 : i64, scratch_operands = 0 : i64, tpu.core_type = #tpu.core_type<tc>, window_params = [{transform_indices = @transform_0, window_bounds = array<i64: 1, 3, 72>}, {pipeline_mode = #tpu.pipeline_mode<synchronous>, transform_indices = @transform_1, window_bounds = array<i64: 72, 512>}, {transform_indices = @transform_2, window_bounds = array<i64: 1, 3, 512>}]} {
    %c0 = arith.constant 0 : index
    %c0_0 = arith.constant 0 : index
    %c0_1 = arith.constant 0 : index
    %0 = vector.load %arg1[%c0, %c0_0, %c0_1] : memref<1x3x72xf32, #tpu.memory_space<vmem>>, vector<1x3x72xf32>
    %1 = vector.shape_cast %0 : vector<1x3x72xf32> to vector<3x72xf32>
    %c0_2 = arith.constant 0 : index
    %c0_3 = arith.constant 0 : index
    %2 = vector.load %arg2[%c0_2, %c0_3] : memref<72x512xf32, #tpu.memory_space<vmem>>, vector<72x512xf32>
    %cst = arith.constant dense<0.000000e+00> : vector<3x512xf32>
    %3 = tpu.matmul %1, %2, %cst {dimension_numbers = #tpu.dot_dimension_numbers<[1], [0], [0], [1], [0, 0, 1, 1], [], []>} : vector<3x72xf32>, vector<72x512xf32>, vector<3x512xf32> -> vector<3x512xf32>
    %c0_4 = arith.constant 0 : index
    %c0_5 = arith.constant 0 : index
    %c0_6 = arith.constant 0 : index
    %4 = vector.load %arg3[%c0_4, %c0_5, %c0_6] : memref<1x3x512xf32, #tpu.memory_space<vmem>>, vector<1x3x512xf32>
    %5 = vector.shape_cast %4 : vector<1x3x512xf32> to vector<3x512xf32>
    %6 = vector.shape_cast %3 : vector<3x512xf32> to vector<1x3x512xf32>
    tpu.vector_store %arg3[%c0_4, %c0_5, %c0_6], %6 {strides = array<i32>} : memref<1x3x512xf32, #tpu.memory_space<vmem>>, vector<1x3x512xf32>,
    return
  }
  func.func @transform_0(%arg0: i32) -> (i32, i32, i32) {
    %c0_i32 = arith.constant 0 : i32
    %c0_i32_0 = arith.constant 0 : i32
    %c0_i32_1 = arith.constant 0 : i32
    return %arg0, %c0_i32, %c0_i32_0 : i32, i32, i32
  }
  func.func @transform_1(%arg0: i32) -> (i32, i32) {
    %c0_i32 = arith.constant 0 : i32
    %c0_i32_0 = arith.constant 0 : i32
    %c0_i32_1 = arith.constant 0 : i32
    return %c0_i32, %c0_i32_0 : i32, i32
  }
  func.func @transform_2(%arg0: i32) -> (i32, i32, i32) {
    %c0_i32 = arith.constant 0 : i32
    %c0_i32_0 = arith.constant 0 : i32
    %c0_i32_1 = arith.constant 0 : i32
    return %arg0, %c0_i32, %c0_i32_0 : i32, i32, i32
  }
}

</mosaic_0001>

<llo_original>
// kernel: tpu_custom_call.1
$region0: #{tpu_custom_call.1}
  #allocation0 [shape = 'u32[]', space=smem, size = 0x4, offset = 0x4, fixed_abs, tag = 'smem constant byte address 0x4 - core index']
  #allocation1 [shape = 'u32[144,128]{1,0:T(1,128)}', space=vmem, size = 0x12000, scoped, tag = 'internal scratch']
  %s0 = inlined_call_operand.vmem [shape: f32[2,3,72], index: 0, kind: input, shape index: {}]
  %s1 = inlined_call_operand.hbm [shape: f32[72,512], index: 1, kind: input, shape index: {}]
  %s2 = inlined_call_operand.vmem [shape: f32[2,3,512], index: 2, kind: output, shape index: {}]
  %s3 = sld [smem:[#allocation0]]
  $region45: #{tpu_custom_call.1} parent=0
    _
  %s5 = ssub.s32 1, %s3
  %s6 = scalar_select 0, %s5, %s3
  $region1: #{tpu_custom_call.1} parent=0
    #allocation2 [shape = 'u8[147456]{0}', space=vmem, size = 0x24000, scoped, tag = 'input window, operand 1, single buffered']
    #allocation3 [shape = 's32[2]{0}', space=sflag, size = 0x8, scoped, tag = 'scoped memory for tpu_custom_call.1']
    %7 = vsyncpa [#allocation3], 0
    loop: start=0, step=1, limit=4
    $region2: #{tpu_custom_call.1} parent=1 // loop_pre_header
      _
    $region3: #{tpu_custom_call.1} parent=1 // loop_header
      %s9 = sphi 0, %s13
      %p10 = scmp.ge.s32.totalorder %s9, 4
      %s19 = sphi 0, %s21
      %s22 = sphi 0, %s19
      %s23 = sphi 0, %s22
      %s39 = sphi 0, %s23
      %s43 = sphi 0, %s43
      %s45 = sphi 0, %s43
      %s46 = sphi 0, %s45
      %s60 = sphi 0, %s46
      %s66 = sphi 0, %s68
      %s69 = sphi 0, %s66
      %s70 = sphi 0, %s69
      %s86 = sphi 0, %s70
    $region4: #{tpu_custom_call.1} parent=1 // loop_header_branch
      %12 = sbr.rel (%p10) target = $region8
    $region5: #{tpu_custom_call.1} parent=1 // loop_body
      %s14 = ssub.s32 %s9, 1
      %s15 = ssub.s32 %s9, 2
      %s16 = sadd.s32 %s9, 1
      %s17 = ssub.s32 %s9, %s16
      %p18 = scmp.eq.s32.totalorder %s17, 0
      %s20 = sadd.s32 %s19, 1
      %s21 = scalar_select %p18, %s19, %s20
      %p24 = pneg %p18
      %p25 = scmp.eq.s32.totalorder %s9, 1
      %p26 = por %p24, %p25
      %p27 = scmp.ne.s32.totalorder %s19, %s22
      %p28 = scmp.eq.s32.totalorder %s9, 0
      %p29 = por %p27, %p28
      %p30 = scmp.ne.s32.totalorder %s19, %s22
      %p31 = scmp.eq.s32.totalorder %s14, 1
      %p32 = por %p30, %p31
      %p33 = scmp.ne.s32.totalorder %s22, %s23
      %p34 = scmp.eq.s32.totalorder %s14, 0
      %p35 = por %p33, %p34
      %p36 = scmp.ne.s32.totalorder %s22, %s23
      %p37 = scmp.eq.s32.totalorder %s15, 1
      %p38 = por %p36, %p37
      %p40 = scmp.ne.s32.totalorder %s23, %s39
      %p41 = scmp.eq.s32.totalorder %s15, 0
      %p42 = por %p40, %p41
      %s44 = sadd.s32 %s43, 1
      %p47 = scmp.eq.s32.totalorder %s9, 1
      %p48 = scmp.ne.s32.totalorder %s43, %s45
      %p49 = scmp.eq.s32.totalorder %s9, 0
      %p50 = por %p48, %p49
      %p51 = scmp.ne.s32.totalorder %s43, %s45
      %p52 = scmp.eq.s32.totalorder %s14, 1
      %p53 = por %p51, %p52
      %p54 = scmp.ne.s32.totalorder %s45, %s46
      %p55 = scmp.eq.s32.totalorder %s14, 0
      %p56 = por %p54, %p55
      %p57 = scmp.ne.s32.totalorder %s45, %s46
      %p58 = scmp.eq.s32.totalorder %s15, 1
      %p59 = por %p57, %p58
      %p61 = scmp.ne.s32.totalorder %s46, %s60
      %p62 = scmp.eq.s32.totalorder %s15, 0
      %p63 = por %p61, %p62
      %s64 = ssub.s32 %s9, %s16
      %p65 = scmp.eq.s32.totalorder %s64, 0
      %s67 = sadd.s32 %s66, 1
      %s68 = scalar_select %p65, %s66, %s67
      %p71 = pneg %p65
      %p72 = scmp.eq.s32.totalorder %s9, 1
      %p73 = por %p71, %p72
      %p74 = scmp.ne.s32.totalorder %s66, %s69
      %p75 = scmp.eq.s32.totalorder %s9, 0
      %p76 = por %p74, %p75
      %p77 = scmp.ne.s32.totalorder %s66, %s69
      %p78 = scmp.eq.s32.totalorder %s14, 1
      %p79 = por %p77, %p78
      %p80 = scmp.ne.s32.totalorder %s69, %s70
      %p81 = scmp.eq.s32.totalorder %s14, 0
      %p82 = por %p80, %p81
      %p83 = scmp.ne.s32.totalorder %s69, %s70
      %p84 = scmp.eq.s32.totalorder %s15, 1
      %p85 = por %p83, %p84
      %p87 = scmp.ne.s32.totalorder %s70, %s86
      %p88 = scmp.eq.s32.totalorder %s15, 0
      %p89 = por %p87, %p88
      %p90 = scmp.le.s32.totalorder 1, %s9
      %p91 = scmp.lt.s32.totalorder %s9, 3
      %p92 = pnand %p90, %p91
      %p93 = pneg %p92
      // Predicated region
      $region9: #{tpu_custom_call.1} parent=5 // pred_check
        _
      $region10: #{tpu_custom_call.1} parent=5 // pred_check_branch
        %95 = sbr.rel (%p92) target = $region12
      $region11: #{tpu_custom_call.1} parent=5 // pred_region
        %s96 = ssub.s32 %s9, 1
        // Predicated region
        $region13: #{tpu_custom_call.1} parent=11 // pred_check
          %p97 = pneg %p56
        $region14: #{tpu_custom_call.1} parent=11 // pred_check_branch
          %99 = sbr.rel (%p97) target = $region16
        $region15: #{tpu_custom_call.1} parent=11 // pred_region
          %s101 = ssub.s32 4608, 4608
          %102 = vsyncadd [#allocation3], %s101
          %s103 = sshll.u32 [#allocation2], 4
          %s104 = int_to_ptr.vmem [resolvable:$true] %s103
          %109 = dma.hbm_to_vmem [thread:$0]  %s1, 4608, %s104, [#allocation3], 512, 512, 32
        $region16: #{tpu_custom_call.1} parent=11 // pred_fallthru
          _
      $region12: #{tpu_custom_call.1} parent=5 // pred_fallthru
        _
      %p110 = scmp.lt.s32.totalorder %s9, 2
      // Predicated region
      $region17: #{tpu_custom_call.1} parent=5 // pred_check
        %p111 = pneg %p110
      $region18: #{tpu_custom_call.1} parent=5 // pred_check_branch
        %113 = sbr.rel (%p111) target = $region20
      $region19: #{tpu_custom_call.1} parent=5 // pred_region
        // Predicated region
        $region21: #{tpu_custom_call.1} parent=19 // pred_check
          %p114 = pneg %p29
        $region22: #{tpu_custom_call.1} parent=19 // pred_check_branch
          %116 = sbr.rel (%p114) target = $region24
        $region23: #{tpu_custom_call.1} parent=19 // pred_region
          %p117 = scmp.lt.s32.totalorder %s9, 1
          %s118 = scalar_select %p117, %s9, 1
          %s119 = smul.addr %s118, 4
          %s120 = scalar_lea.vmem %s0, %s119
        $region24: #{tpu_custom_call.1} parent=19 // pred_fallthru
          _
      $region20: #{tpu_custom_call.1} parent=5 // pred_fallthru
        _
      %p121 = scmp.le.s32.totalorder 1, %s9
      %p122 = scmp.lt.s32.totalorder %s9, 3
      %p123 = pnand %p121, %p122
      %p124 = pneg %p123
      // Predicated region
      $region25: #{tpu_custom_call.1} parent=5 // pred_check
        _
      $region26: #{tpu_custom_call.1} parent=5 // pred_check_branch
        %126 = sbr.rel (%p123) target = $region28
      $region27: #{tpu_custom_call.1} parent=5 // pred_region
        %s127 = ssub.s32 %s9, 1
        // Predicated region
        $region29: #{tpu_custom_call.1} parent=27 // pred_check
          %p128 = pneg %p56
        $region30: #{tpu_custom_call.1} parent=27 // pred_check_branch
          %130 = sbr.rel (%p128) target = $region32
        $region31: #{tpu_custom_call.1} parent=27 // pred_region
          %131 = dma.done [#allocation3], 4608
        $region32: #{tpu_custom_call.1} parent=27 // pred_fallthru
          _
        %p132 = scmp.lt.s32.totalorder %s14, 1
        %s133 = scalar_select %p132, %s14, 1
        %s134 = smul.addr %s133, 4
        %s135 = scalar_lea.vmem %s0, %s134
        %p136 = pneg %p35
        %p137 = pneg %p32
        %p138 = pneg %p56
        %p139 = pneg %p53
        %p140 = pneg %p82
        %p141 = pneg %p79
        %p142 = scmp.lt.s32.totalorder %s14, 1
        %s143 = scalar_select %p142, %s14, 1
        %s144 = smul.addr %s143, 4
        %s145 = smul.addr %s144, 4
        %s146 = scalar_lea.vmem %s2, %s145
        %p147 = scmp.lt.s32.totalorder %s14, 1
        %s148 = scalar_select %p147, %s14, 1
        %s149 = smul.addr %s148, 4
        %s150 = scalar_lea.vmem %s0, %s149
        %p151 = scmp.lt.s32.totalorder %s14, 1
        %s152 = scalar_select %p151, %s14, 1
        %s153 = smul.addr %s152, 4
        %s154 = smul.addr %s153, 4
        %s155 = scalar_lea.vmem %s2, %s154
        %v156 = vld [vmem:[%s150] sm:$0x7]
        %v157 = vld [vmem:[#allocation2] sm:$0xff]
        %v158 = vld [vmem:[#allocation2 + $0x8] sm:$0xff]
        %v159 = vld [vmem:[#allocation2 + $0x10] sm:$0xff]
        %v160 = vld [vmem:[#allocation2 + $0x18] sm:$0xff]
        %v161 = vld [vmem:[#allocation2 + $0x20] sm:$0xff]
        %v162 = vld [vmem:[#allocation2 + $0x28] sm:$0xff]
        %v163 = vld [vmem:[#allocation2 + $0x30] sm:$0xff]
        %v164 = vld [vmem:[#allocation2 + $0x38] sm:$0xff]
        %v165 = vld [vmem:[#allocation2 + $0x40] sm:$0xff]
        %v166 = vld [vmem:[#allocation2 + $0x48] sm:$0xff]
        %v167 = vld [vmem:[#allocation2 + $0x50] sm:$0xff]
        %v168 = vld [vmem:[#allocation2 + $0x58] sm:$0xff]
        %v169 = vld [vmem:[#allocation2 + $0x60] sm:$0xff]
        %v170 = vld [vmem:[#allocation2 + $0x68] sm:$0xff]
        %v171 = vld [vmem:[#allocation2 + $0x70] sm:$0xff]
        %v172 = vld [vmem:[#allocation2 + $0x78] sm:$0xff]
        %v173 = vld [vmem:[#allocation2 + $0x80] sm:$0xff]
        %v174 = vld [vmem:[#allocation2 + $0x88] sm:$0xff]
        %v175 = vld [vmem:[#allocation2 + $0x90] sm:$0xff]
        %v176 = vld [vmem:[#allocation2 + $0x98] sm:$0xff]
        %v177 = vld [vmem:[#allocation2 + $0xa0] sm:$0xff]
        %v178 = vld [vmem:[#allocation2 + $0xa8] sm:$0xff]
        %v179 = vld [vmem:[#allocation2 + $0xb0] sm:$0xff]
        %v180 = vld [vmem:[#allocation2 + $0xb8] sm:$0xff]
        %v181 = vld [vmem:[#allocation2 + $0xc0] sm:$0xff]
        %v182 = vld [vmem:[#allocation2 + $0xc8] sm:$0xff]
        %v183 = vld [vmem:[#allocation2 + $0xd0] sm:$0xff]
        %v184 = vld [vmem:[#allocation2 + $0xd8] sm:$0xff]
        %v185 = vld [vmem:[#allocation2 + $0xe0] sm:$0xff]
        %v186 = vld [vmem:[#allocation2 + $0xe8] sm:$0xff]
        %v187 = vld [vmem:[#allocation2 + $0xf0] sm:$0xff]
        %v188 = vld [vmem:[#allocation2 + $0xf8] sm:$0xff]
        %v189 = vld [vmem:[#allocation2 + $0x100] sm:$0xff]
        %v190 = vld [vmem:[#allocation2 + $0x108] sm:$0xff]
        %v191 = vld [vmem:[#allocation2 + $0x110] sm:$0xff]
        %v192 = vld [vmem:[#allocation2 + $0x118] sm:$0xff]
        %vm193 = vcmask 588800
        %v195 = vsel %vm193, %v156, 0
        %197 = vmatprep.subr.mxu0 %v158
        %198 = vmatpush1.msra.mxu0 %v157
        %199 = vmatprep.subr.mxu0 %v162
        %200 = vmatpush1.msra.mxu0 %v161
        %201 = vmatprep.subr.mxu0 %v166
        %202 = vmatpush1.msra.mxu0 %v165
        %203 = vmatprep.subr.mxu0 %v170
        %204 = vmatpush1.msra.mxu0 %v169
        %205 = vmatprep.subr.mxu0 %v174
        %206 = vmatpush1.msra.mxu0 %v173
        %207 = vmatprep.subr.mxu0 %v178
        %208 = vmatpush1.msra.mxu0 %v177
        %209 = vmatprep.subr.mxu0 %v182
        %210 = vmatpush1.msra.mxu0 %v181
        %211 = vmatprep.subr.mxu0 %v186
        %212 = vmatpush1.msra.mxu0 %v185
        %213 = vmatprep.subr.mxu0 %v190
        %214 = vmatpush1.msra.mxu0 %v189
        %215 = vmatprep.subr.mxu0 0.0
        %216 = vmatpush1.msra.mxu0 0.0
        %217 = vmatprep.subr.mxu0 0.0
        %218 = vmatpush1.msra.mxu0 0.0
        %219 = vmatprep.subr.mxu0 0.0
        %220 = vmatpush1.msra.mxu0 0.0
        %221 = vmatprep.subr.mxu0 0.0
        %222 = vmatpush1.msra.mxu0 0.0
        %223 = vmatprep.subr.mxu0 0.0
        %224 = vmatpush1.msra.mxu0 0.0
        %225 = vmatprep.subr.mxu0 0.0
        %226 = vmatpush1.msra.mxu0 0.0
        %227 = vmatprep.subr.mxu0 0.0
        %228 = vmatpush1.msra.mxu0 0.0
        %229 = vmatprep.subr.mxu0 0.0
        %230 = vmatpush1.msra.mxu0 0.0
        %231 = vmatprep.subr.mxu0 0.0
        %232 = vmatpush1.msra.mxu0 0.0
        %233 = vmatprep.subr.mxu0 0.0
        %234 = vmatpush1.msra.mxu0 0.0
        %235 = vmatprep.subr.mxu0 0.0
        %236 = vmatpush1.msra.mxu0 0.0
        %237 = vmatprep.subr.mxu0 0.0
        %238 = vmatpush1.msra.mxu0 0.0
        %239 = vmatprep.subr.mxu0 0.0
        %240 = vmatpush1.msra.mxu0 0.0
        %241 = vmatprep.subr.mxu0 0.0
        %242 = vmatpush1.msra.mxu0 0.0
        %243 = vmatprep.subr.mxu0 0.0
        %244 = vmatpush1.msra.mxu0 0.0
        %245 = vmatprep.subr.mxu0 0.0
        %246 = vmatpush1.msra.mxu0 0.0
        %247 = vmatprep.subr.mxu0 0.0
        %248 = vmatpush1.msra.mxu0 0.0
        %249 = vmatprep.subr.mxu0 0.0
        %250 = vmatpush1.msra.mxu0 0.0
        %251 = vmatprep.subr.mxu0 0.0
        %252 = vmatpush1.msra.mxu0 0.0
        %253 = vmatprep.subr.mxu0 0.0
        %254 = vmatpush1.msra.mxu0 0.0
        %255 = vmatprep.subr.mxu0 0.0
        %256 = vmatpush1.msra.mxu0 0.0
        %257 = vmatprep.subr.mxu0 0.0
        %258 = vmatpush1.msra.mxu0 0.0
        %259 = vmatprep.subr.mxu0 0.0
        %260 = vmatpush1.msra.mxu0 0.0
        %261 = vmatprep.mubr.f32.mxu0 0.0
        %262 = vmatmul.mubr.f32.gmra.mrb[0].mxu0 %v195
        %v263 = vpop.f32.mrb[0].mxu0
        %v264 = vadd.f32 0.0, %v263
        %v265 = vpop.f32.mrb[0].mxu0
        %v266 = vadd.f32 0.0, %v265
        %267 = vdwg.mxu0
        %268 = vmatprep.subr.mxu0 %v160
        %269 = vmatpush1.msra.mxu0 %v159
        %270 = vmatprep.subr.mxu0 %v164
        %271 = vmatpush1.msra.mxu0 %v163
        %272 = vmatprep.subr.mxu0 %v168
        %273 = vmatpush1.msra.mxu0 %v167
        %274 = vmatprep.subr.mxu0 %v172
        %275 = vmatpush1.msra.mxu0 %v171
        %276 = vmatprep.subr.mxu0 %v176
        %277 = vmatpush1.msra.mxu0 %v175
        %278 = vmatprep.subr.mxu0 %v180
        %279 = vmatpush1.msra.mxu0 %v179
        %280 = vmatprep.subr.mxu0 %v184
        %281 = vmatpush1.msra.mxu0 %v183
        %282 = vmatprep.subr.mxu0 %v188
        %283 = vmatpush1.msra.mxu0 %v187
        %284 = vmatprep.subr.mxu0 %v192
        %285 = vmatpush1.msra.mxu0 %v191
        %286 = vmatprep.subr.mxu0 0.0
        %287 = vmatpush1.msra.mxu0 0.0
        %288 = vmatprep.subr.mxu0 0.0
        %289 = vmatpush1.msra.mxu0 0.0
        %290 = vmatprep.subr.mxu0 0.0
        %291 = vmatpush1.msra.mxu0 0.0
        %292 = vmatprep.subr.mxu0 0.0
        %293 = vmatpush1.msra.mxu0 0.0
        %294 = vmatprep.subr.mxu0 0.0
        %295 = vmatpush1.msra.mxu0 0.0
        %296 = vmatprep.subr.mxu0 0.0
        %297 = vmatpush1.msra.mxu0 0.0
        %298 = vmatprep.subr.mxu0 0.0
        %299 = vmatpush1.msra.mxu0 0.0
        %300 = vmatprep.subr.mxu0 0.0
        %301 = vmatpush1.msra.mxu0 0.0
        %302 = vmatprep.subr.mxu0 0.0
        %303 = vmatpush1.msra.mxu0 0.0
        %304 = vmatprep.subr.mxu0 0.0
        %305 = vmatpush1.msra.mxu0 0.0
        %306 = vmatprep.subr.mxu0 0.0
        %307 = vmatpush1.msra.mxu0 0.0
        %308 = vmatprep.subr.mxu0 0.0
        %309 = vmatpush1.msra.mxu0 0.0
        %310 = vmatprep.subr.mxu0 0.0
        %311 = vmatpush1.msra.mxu0 0.0
        %312 = vmatprep.subr.mxu0 0.0
        %313 = vmatpush1.msra.mxu0 0.0
        %314 = vmatprep.subr.mxu0 0.0
        %315 = vmatpush1.msra.mxu0 0.0
        %316 = vmatprep.subr.mxu0 0.0
        %317 = vmatpush1.msra.mxu0 0.0
        %318 = vmatprep.subr.mxu0 0.0
        %319 = vmatpush1.msra.mxu0 0.0
        %320 = vmatprep.subr.mxu0 0.0
        %321 = vmatpush1.msra.mxu0 0.0
        %322 = vmatprep.subr.mxu0 0.0
        %323 = vmatpush1.msra.mxu0 0.0
        %324 = vmatprep.subr.mxu0 0.0
        %325 = vmatpush1.msra.mxu0 0.0
        %326 = vmatprep.subr.mxu0 0.0
        %327 = vmatpush1.msra.mxu0 0.0
        %328 = vmatprep.subr.mxu0 0.0
        %329 = vmatpush1.msra.mxu0 0.0
        %330 = vmatprep.subr.mxu0 0.0
        %331 = vmatpush1.msra.mxu0 0.0
        %332 = vmatprep.mubr.f32.mxu0 0.0
        %333 = vmatmul.mubr.f32.gmra.mrb[0].mxu0 %v195
        %v334 = vpop.f32.mrb[0].mxu0
        %v335 = vadd.f32 0.0, %v334
        %v336 = vpop.f32.mrb[0].mxu0
        %v337 = vadd.f32 0.0, %v336
        %338 = vdwg.mxu0
        %v343 = vcombine.low %v264, %v266
        %v344 = vcombine.low %v335, %v337
        %347 = vst [vmem:[%s155] sm:$0x77] %v343
        %348 = vst [vmem:[%s155 + $0x8] sm:$0x77] %v344
        %p349 = scmp.lt.s32.totalorder %s14, 1
        %s350 = scalar_select %p349, %s14, 1
        %s351 = smul.addr %s350, 4
        %s352 = smul.addr %s351, 4
        %s353 = scalar_lea.vmem %s2, %s352
        // Predicated region
        $region33: #{tpu_custom_call.1} parent=27 // pred_check
          %p354 = pneg %p79
        $region34: #{tpu_custom_call.1} parent=27 // pred_check_branch
          %356 = sbr.rel (%p354) target = $region36
        $region35: #{tpu_custom_call.1} parent=27 // pred_region
          _
        $region36: #{tpu_custom_call.1} parent=27 // pred_fallthru
          _
      $region28: #{tpu_custom_call.1} parent=5 // pred_fallthru
        _
      %p357 = scmp.le.s32.totalorder 2, %s9
      // Predicated region
      $region37: #{tpu_custom_call.1} parent=5 // pred_check
        %p358 = pneg %p357
      $region38: #{tpu_custom_call.1} parent=5 // pred_check_branch
        %360 = sbr.rel (%p358) target = $region40
      $region39: #{tpu_custom_call.1} parent=5 // pred_region
        %s361 = ssub.s32 %s9, 2
        // Predicated region
        $region41: #{tpu_custom_call.1} parent=39 // pred_check
          %p362 = pneg %p85
        $region42: #{tpu_custom_call.1} parent=39 // pred_check_branch
          %364 = sbr.rel (%p362) target = $region44
        $region43: #{tpu_custom_call.1} parent=39 // pred_region
          %p365 = scmp.lt.s32.totalorder %s15, 1
          %s366 = scalar_select %p365, %s15, 1
          %s367 = smul.addr %s366, 4
          %s368 = smul.addr %s367, 4
          %s369 = scalar_lea.vmem %s2, %s368
        $region44: #{tpu_custom_call.1} parent=39 // pred_fallthru
          _
      $region40: #{tpu_custom_call.1} parent=5 // pred_fallthru
        _
    $region6: #{tpu_custom_call.1} parent=1 // loop_footer
      %s13 = sadd.s32 1, %s9
    $region7: #{tpu_custom_call.1} parent=1 // loop_footer_branch
      %8 = sbr.rel target = $region3
    $region8: #{tpu_custom_call.1} parent=1 // loop_exit
      _
    %370 = vsyncpa [#allocation3], 1
    %s371 = scalar_lea.sflag [#allocation3], 1
    %372 = vsyncpa %s371, 1

</llo_original>
